<compile_context>
chip_gen: v6e
topology: v6e:2x2x1
jax: 0.10.0
libtpu: 0.0.40
codegen_flags: <defaults>
</compile_context>

<pallas_src>
import functools

import jax
import jax.numpy as jnp
from jax.experimental import pallas as pl
from jax.experimental.pallas import tpu as pltpu

# ----------------------------- module config ------------------------------
ALPHA_LIST = [0.002, 0.002, 0.088, 0.044, 0.004, 0.05, 0.063, 0.044, 0.23,
              0.109, 0.048, 0.163, 0.087, 0.02, 0.046]
NUM_CLASS = len(ALPHA_LIST)          # assert len(alpha) == num_class in __init__
GAMMA = 2
SMOOTH = None                        # TODO(synk): smooth branch unused (default None)
SIZE_AVERAGE = True
EPS = 1e-10


# ------------------------------ Pallas kernel ------------------------------
def _focal_partial_kernel(x_ref, t_ref, alpha_ref, a_out_ref, f_out_ref, *,
                          gamma, hw, tn, eps, n_inner, total_tiles):
    """Per-pixel focal terms; accumulates lane-wide partial sums A and F."""
    @pl.when(pl.program_id(2) == 0)
    def _init():
        a_out_ref[...] = jnp.zeros_like(a_out_ref)
        f_out_ref[...] = jnp.zeros_like(f_out_ref)

    x = x_ref[...].astype(jnp.float32)            # (C, tn)  classes on sublanes
    tgt = t_ref[...]                              # (1, tn)  int32 class ids

    # log-softmax over the class (sublane) axis -- dim=1 of the torch module
    m = jnp.max(x, axis=0, keepdims=True)                               # (1, tn)
    shifted = x - m                                                     # (C, tn)
    lse = jnp.log(jnp.sum(jnp.exp(shifted), axis=0, keepdims=True))     # (1, tn)

    # one-hot as a boolean mask: (C,1) iota column vs (1,tn) target (broadcast
    # compare) -- no (C,tn) iota materialised, no convert, no multiply.
    cls_col = jax.lax.broadcasted_iota(jnp.int32, (x.shape[0], 1), 0)   # (C, 1)
    mask = cls_col == tgt                                               # (C, tn)

    x_t = jnp.sum(jnp.where(mask, shifted, 0.0), axis=0, keepdims=True)  # (1, tn)
    logp = x_t - lse                                                     # log softmax[target]

    # torch: pt = softmax[target] + eps ; logpt = log(pt)
    pt = jnp.exp(logp) + eps
    logpt = jnp.log(pt)

    # alpha[target]: masked sublane reduce of the tiny (C,1) alpha column
    alpha_t = jnp.sum(jnp.where(mask, alpha_ref[...], 0.0),
                      axis=0, keepdims=True)                             # (1, tn)

    one_minus = 1.0 - pt
    if isinstance(gamma, int):
        focal_w = jax.lax.integer_pow(one_minus, gamma)   # gamma=2 -> one VPU multiply
    else:
        # TODO(synk): float-gamma path clamps slightly-negative (1-pt) where torch would NaN
        focal_w = jnp.power(jnp.maximum(one_minus, 0.0), jnp.float32(gamma))
    focal = focal_w * (-logpt)                                           # (1, tn)

    if hw % tn != 0:
        # Only the single last spatial tile is partial: gate the masking so
        # full tiles pay nothing.  Keep it a SELECT (jnp.where) so garbage
        # logits past HW (possibly Inf/NaN through exp/log) never propagate.
        rem = hw - (total_tiles - 1) * tn                 # static remainder
        is_last = (pl.program_id(1) * n_inner + pl.program_id(2)) == (total_tiles - 1)

        @pl.when(is_last)
        def _masked_tile():
            lane = jax.lax.broadcasted_iota(jnp.int32, (1, tn), 1)
            valid = lane < rem
            a_out_ref[...] += jnp.where(valid, alpha_t, 0.0)
            f_out_ref[...] += jnp.where(valid, focal, 0.0)

        @pl.when(jnp.logical_not(is_last))
        def _full_tile():
            a_out_ref[...] += alpha_t
            f_out_ref[...] += focal
    else:
        a_out_ref[...] += alpha_t
        f_out_ref[...] += focal


# ------------------------------ JAX wrapper --------------------------------
def focal_loss(inputs, target, *, num_class=NUM_CLASS, alpha=ALPHA_LIST,
               gamma=GAMMA, size_average=SIZE_AVERAGE, tn=65536):
    """inputs: (B, C, H, W) float logits (NCHW, f32 or bf16). target: (B, H, W) ints."""
    B, C, H, W = inputs.shape
    assert C == num_class
    HW = H * W
    M = B * HW

    # Consume NCHW directly: classes -> sublanes, spatial -> lanes (no transpose).
    logits = inputs.reshape(B, C, HW)
    target3d = target.reshape(B, 1, HW).astype(jnp.int32)

    s = float(sum(alpha))
    alpha_norm = tuple(float(a) / s for a in alpha)              # alpha / alpha.sum()
    alpha_col = jnp.asarray(alpha_norm, jnp.float32).reshape(num_class, 1)

    # Lane-tile width: full spatial dim if it fits, else a multiple of 128.
    tn = int(tn)
    if HW <= tn:
        # Give v7x megacore two spatial super-tiles even when B == 1.
        if B == 1 and HW >= 512 and HW % 256 == 0:
            tn = HW // 2
        else:
            tn = HW
    else:
        tn = max(128, (tn // 128) * 128)
    n_total = pl.cdiv(HW, tn)

    # Second "parallel" axis: split spatial tiles into S super-tiles so both
    # v7x TensorCores are busy even for B == 1 (no-op cost on v5e/v6e).
    S = 2 if (n_total >= 2 and n_total % 2 == 0) else 1
    n_inner = n_total // S

    kernel = functools.partial(_focal_partial_kernel, gamma=gamma, hw=HW, tn=tn,
                               eps=EPS, n_inner=n_inner, total_tiles=n_total)

    a_part, f_part = pl.pallas_call(
        kernel,
        out_shape=(jax.ShapeDtypeStruct((B, S, 1, tn), jnp.float32),
                   jax.ShapeDtypeStruct((B, S, 1, tn), jnp.float32)),
        grid_spec=pltpu.PrefetchScalarGridSpec(
            num_scalar_prefetch=0,
            grid=(B, S, n_inner),
            in_specs=[
                pl.BlockSpec((None, C, tn),
                             lambda b, sp, n: (b, 0, sp * n_inner + n)),   # logits tile
                pl.BlockSpec((None, 1, tn),
                             lambda b, sp, n: (b, 0, sp * n_inner + n)),   # target tile
                pl.BlockSpec((C, 1), lambda b, sp, n: (0, 0)),             # alpha column (tiny, resident)
            ],
            out_specs=[
                pl.BlockSpec((None, None, 1, tn), lambda b, sp, n: (b, sp, 0, 0)),  # A partials
                pl.BlockSpec((None, None, 1, tn), lambda b, sp, n: (b, sp, 0, 0)),  # F partials
            ],
        ),
        compiler_params=pltpu.CompilerParams(
            dimension_semantics=("parallel", "parallel", "arbitrary"),
            vmem_limit_bytes=32 * 1024 * 1024),   # v5e default is only 16 MiB; raise explicitly
    )(logits, target3d, alpha_col)

    A = jnp.sum(a_part)
    F = jnp.sum(f_part)
    prod = A * F
    if size_average:
        # mean over the (M,1,M) broadcast tensor of the original torch code
        return prod / jnp.float32(float(M) * float(M))
    return prod                                      # sum over the (M,1,M) tensor


# --------------------------- pure-JAX reference -----------------------------
def focal_loss_ref(inputs, target):
    B, C, H, W = inputs.shape
    logit = jax.nn.softmax(inputs.astype(jnp.float32), axis=1)
    logit = jnp.transpose(logit, (0, 2, 3, 1)).reshape(-1, C)
    tgt = target.reshape(-1).astype(jnp.int32)
    M = tgt.shape[0]
    alpha = jnp.asarray(ALPHA_LIST, dtype=jnp.float32)
    alpha = alpha / jnp.sum(alpha)
    one_hot = jax.nn.one_hot(tgt, C, dtype=jnp.float32)
    pt = jnp.sum(one_hot * logit, axis=1) + EPS
    logpt = jnp.log(pt)
    alpha_t = alpha[tgt]
    # exact outer-product-mean semantics of the torch broadcast
    A = jnp.sum(alpha_t)
    F = jnp.sum(jax.lax.integer_pow(1.0 - pt, GAMMA) * (-logpt))
    return (A * F) / jnp.float32(M * M)


if __name__ == "__main__":
    key = jax.random.PRNGKey(0)
    k1, k2, k3, k4 = jax.random.split(key, 4)

    # Test 1: B=2, square spatial, single full tile per batch.
    B, C, H, W = 2, NUM_CLASS, 16, 16              # M = 2*16*16 = 512 pixels
    x = jax.random.normal(k1, (B, C, H, W), dtype=jnp.float32)
    tgt = jax.random.randint(k2, (B, H, W), 0, C, dtype=jnp.int32)
    out = jax.block_until_ready(focal_loss(x, tgt))
    ref = jax.block_until_ready(focal_loss_ref(x, tgt))
    assert jnp.allclose(out, ref, rtol=1e-5, atol=1e-6), (out, ref)

    # Test 2: B=1, HW not a multiple of the tile -> exercises the super-tile
    # split (S=2) and the gated partial-last-tile masking path.
    B2, H2, W2 = 1, 16, 24                          # HW = 384, tn = 256 -> rem 128
    x2 = jax.random.normal(k3, (B2, C, H2, W2), dtype=jnp.float32)
    tgt2 = jax.random.randint(k4, (B2, H2, W2), 0, C, dtype=jnp.int32)
    out2 = jax.block_until_ready(focal_loss(x2, tgt2, tn=256))
    ref2 = jax.block_until_ready(focal_loss_ref(x2, tgt2))
    assert jnp.allclose(out2, ref2, rtol=1e-5, atol=1e-6), (out2, ref2)

    print("KERNEL_OK")
</pallas_src>

<mosaic_0001>
module attributes {stable_mosaic.version = 11 : i64} {
  func.func @_focal_partial_kernel(%arg0: i32, %arg1: i32, %arg2: i32, %arg3: memref<1x15x256xf32, #tpu.memory_space<vmem>>, %arg4: memref<1x1x256xi32, #tpu.memory_space<vmem>>, %arg5: memref<15x1xf32, #tpu.memory_space<vmem>>, %arg6: memref<1x1x1x256xf32, #tpu.memory_space<vmem>>, %arg7: memref<1x1x1x256xf32, #tpu.memory_space<vmem>>) attributes {dimension_semantics = [#tpu.dimension_semantics<parallel>, #tpu.dimension_semantics<parallel>, #tpu.dimension_semantics<arbitrary>], iteration_bounds = array<i64: 2, 1, 1>, scalar_prefetch = 0 : i64, scratch_operands = 0 : i64, tpu.core_type = #tpu.core_type<tc>, window_params = [{transform_indices = @transform_0, window_bounds = array<i64: 1, 15, 256>}, {transform_indices = @transform_1, window_bounds = array<i64: 1, 1, 256>}, {pipeline_mode = #tpu.pipeline_mode<synchronous>, transform_indices = @transform_2, window_bounds = array<i64: 15, 1>}, {transform_indices = @transform_3, window_bounds = array<i64: 1, 1, 1, 256>}, {transform_indices = @transform_4, window_bounds = array<i64: 1, 1, 1, 256>}]} {
    %c0_i32 = arith.constant 0 : i32
    %0 = arith.cmpi eq, %arg2, %c0_i32 : i32
    %1 = arith.extui %0 : i1 to i32
    %c0_i32_0 = arith.constant 0 : i32
    %2 = arith.cmpi ne, %1, %c0_i32_0 : i32
    scf.if %2 {
      %cst_32 = arith.constant 0.000000e+00 : f32
      %53 = vector.broadcast %cst_32 : f32 to vector<1x256xf32>
      %c0_33 = arith.constant 0 : index
      %c0_34 = arith.constant 0 : index
      %c0_35 = arith.constant 0 : index
      %c0_36 = arith.constant 0 : index
      %54 = vector.load %arg6[%c0_33, %c0_34, %c0_35, %c0_36] : memref<1x1x1x256xf32, #tpu.memory_space<vmem>>, vector<1x1x1x256xf32>
      %55 = vector.shape_cast %54 : vector<1x1x1x256xf32> to vector<1x256xf32>
      %56 = vector.shape_cast %53 : vector<1x256xf32> to vector<1x1x1x256xf32>
      tpu.vector_store %arg6[%c0_33, %c0_34, %c0_35, %c0_36], %56 {strides = array<i32>} : memref<1x1x1x256xf32, #tpu.memory_space<vmem>>, vector<1x1x1x256xf32>,
      %cst_37 = arith.constant 0.000000e+00 : f32
      %57 = vector.broadcast %cst_37 : f32 to vector<1x256xf32>
      %c0_38 = arith.constant 0 : index
      %c0_39 = arith.constant 0 : index
      %c0_40 = arith.constant 0 : index
      %c0_41 = arith.constant 0 : index
      %58 = vector.load %arg7[%c0_38, %c0_39, %c0_40, %c0_41] : memref<1x1x1x256xf32, #tpu.memory_space<vmem>>, vector<1x1x1x256xf32>
      %59 = vector.shape_cast %58 : vector<1x1x1x256xf32> to vector<1x256xf32>
      %60 = vector.shape_cast %57 : vector<1x256xf32> to vector<1x1x1x256xf32>
      tpu.vector_store %arg7[%c0_38, %c0_39, %c0_40, %c0_41], %60 {strides = array<i32>} : memref<1x1x1x256xf32, #tpu.memory_space<vmem>>, vector<1x1x1x256xf32>,
    } else {
    }
    %c0 = arith.constant 0 : index
    %c0_1 = arith.constant 0 : index
    %c0_2 = arith.constant 0 : index
    %3 = vector.load %arg3[%c0, %c0_1, %c0_2] : memref<1x15x256xf32, #tpu.memory_space<vmem>>, vector<1x15x256xf32>
    %4 = vector.shape_cast %3 : vector<1x15x256xf32> to vector<15x256xf32>
    %c0_3 = arith.constant 0 : index
    %c0_4 = arith.constant 0 : index
    %c0_5 = arith.constant 0 : index
    %5 = vector.load %arg4[%c0_3, %c0_4, %c0_5] : memref<1x1x256xi32, #tpu.memory_space<vmem>>, vector<1x1x256xi32>
    %6 = vector.shape_cast %5 : vector<1x1x256xi32> to vector<1x256xi32>
    %cst = arith.constant dense<0xFF800000> : vector<256xf32>
    %7 = vector.multi_reduction <maximumf>, %4, %cst [0] : vector<15x256xf32> to vector<256xf32>
    %8 = vector.shape_cast %7 : vector<256xf32> to vector<1x256xf32>
    %9 = vector.broadcast %8 : vector<1x256xf32> to vector<15x256xf32>
    %10 = arith.subf %4, %9 : vector<15x256xf32>
    %11 = math.exp %10 : vector<15x256xf32>
    %cst_6 = arith.constant dense<0.000000e+00> : vector<256xf32>
    %12 = vector.multi_reduction <add>, %11, %cst_6 [0] : vector<15x256xf32> to vector<256xf32>
    %13 = vector.shape_cast %12 : vector<256xf32> to vector<1x256xf32>
    %14 = math.log %13 : vector<1x256xf32>
    %15 = tpu.iota {dimensions = array<i32: 0>} : vector<15x1xi32>
    %16 = vector.broadcast %15 : vector<15x1xi32> to vector<15x256xi32>
    %17 = vector.broadcast %6 : vector<1x256xi32> to vector<15x256xi32>
    %18 = arith.cmpi eq, %16, %17 : vector<15x256xi32>
    %cst_7 = arith.constant 0.000000e+00 : f32
    %19 = vector.broadcast %cst_7 : f32 to vector<15x256xf32>
    %20 = arith.select %18, %10, %19 : vector<15x256xi1>, vector<15x256xf32>
    %cst_8 = arith.constant dense<0.000000e+00> : vector<256xf32>
    %21 = vector.multi_reduction <add>, %20, %cst_8 [0] : vector<15x256xf32> to vector<256xf32>
    %22 = vector.shape_cast %21 : vector<256xf32> to vector<1x256xf32>
    %23 = arith.subf %22, %14 : vector<1x256xf32>
    %24 = math.exp %23 : vector<1x256xf32>
    %cst_9 = arith.constant 1.000000e-10 : f32
    %25 = vector.broadcast %cst_9 : f32 to vector<1x256xf32>
    %26 = arith.addf %24, %25 : vector<1x256xf32>
    %27 = math.log %26 : vector<1x256xf32>
    %c0_10 = arith.constant 0 : index
    %c0_11 = arith.constant 0 : index
    %28 = vector.load %arg5[%c0_10, %c0_11] : memref<15x1xf32, #tpu.memory_space<vmem>>, vector<15x1xf32>
    %cst_12 = arith.constant 0.000000e+00 : f32
    %29 = vector.shape_cast %28 : vector<15x1xf32> to vector<15x1xf32>
    %30 = vector.broadcast %29 : vector<15x1xf32> to vector<15x256xf32>
    %31 = vector.broadcast %cst_12 : f32 to vector<15x256xf32>
    %32 = arith.select %18, %30, %31 : vector<15x256xi1>, vector<15x256xf32>
    %cst_13 = arith.constant dense<0.000000e+00> : vector<256xf32>
    %33 = vector.multi_reduction <add>, %32, %cst_13 [0] : vector<15x256xf32> to vector<256xf32>
    %34 = vector.shape_cast %33 : vector<256xf32> to vector<1x256xf32>
    %cst_14 = arith.constant 1.000000e+00 : f32
    %35 = vector.broadcast %cst_14 : f32 to vector<1x256xf32>
    %36 = arith.subf %35, %26 : vector<1x256xf32>
    %37 = arith.mulf %36, %36 : vector<1x256xf32>
    %cst_15 = arith.constant 0.000000e+00 : f32
    %38 = vector.broadcast %cst_15 : f32 to vector<1x256xf32>
    %39 = arith.subf %38, %27 : vector<1x256xf32>
    %40 = arith.mulf %37, %39 : vector<1x256xf32>
    %c0_16 = arith.constant 0 : index
    %c0_17 = arith.constant 0 : index
    %c0_18 = arith.constant 0 : index
    %c0_19 = arith.constant 0 : index
    %41 = vector.load %arg6[%c0_16, %c0_17, %c0_18, %c0_19] : memref<1x1x1x256xf32, #tpu.memory_space<vmem>>, vector<1x1x1x256xf32>
    %42 = vector.shape_cast %41 : vector<1x1x1x256xf32> to vector<1x256xf32>
    %43 = arith.addf %42, %34 : vector<1x256xf32>
    %c0_20 = arith.constant 0 : index
    %c0_21 = arith.constant 0 : index
    %c0_22 = arith.constant 0 : index
    %c0_23 = arith.constant 0 : index
    %44 = vector.load %arg6[%c0_20, %c0_21, %c0_22, %c0_23] : memref<1x1x1x256xf32, #tpu.memory_space<vmem>>, vector<1x1x1x256xf32>
    %45 = vector.shape_cast %44 : vector<1x1x1x256xf32> to vector<1x256xf32>
    %46 = vector.shape_cast %43 : vector<1x256xf32> to vector<1x1x1x256xf32>
    tpu.vector_store %arg6[%c0_20, %c0_21, %c0_22, %c0_23], %46 {strides = array<i32>} : memref<1x1x1x256xf32, #tpu.memory_space<vmem>>, vector<1x1x1x256xf32>,
    %c0_24 = arith.constant 0 : index
    %c0_25 = arith.constant 0 : index
    %c0_26 = arith.constant 0 : index
    %c0_27 = arith.constant 0 : index
    %47 = vector.load %arg7[%c0_24, %c0_25, %c0_26, %c0_27] : memref<1x1x1x256xf32, #tpu.memory_space<vmem>>, vector<1x1x1x256xf32>
    %48 = vector.shape_cast %47 : vector<1x1x1x256xf32> to vector<1x256xf32>
    %49 = arith.addf %48, %40 : vector<1x256xf32>
    %c0_28 = arith.constant 0 : index
    %c0_29 = arith.constant 0 : index
    %c0_30 = arith.constant 0 : index
    %c0_31 = arith.constant 0 : index
    %50 = vector.load %arg7[%c0_28, %c0_29, %c0_30, %c0_31] : memref<1x1x1x256xf32, #tpu.memory_space<vmem>>, vector<1x1x1x256xf32>
    %51 = vector.shape_cast %50 : vector<1x1x1x256xf32> to vector<1x256xf32>
    %52 = vector.shape_cast %49 : vector<1x256xf32> to vector<1x1x1x256xf32>
    tpu.vector_store %arg7[%c0_28, %c0_29, %c0_30, %c0_31], %52 {strides = array<i32>} : memref<1x1x1x256xf32, #tpu.memory_space<vmem>>, vector<1x1x1x256xf32>,
    return
  }
  func.func @transform_0(%arg0: i32, %arg1: i32, %arg2: i32) -> (i32, i32, i32) {
    %c1_i32 = arith.constant 1 : i32
    %0 = arith.muli %arg1, %c1_i32 : i32
    %1 = arith.addi %0, %arg2 : i32
    %c0_i32 = arith.constant 0 : i32
    %c0_i32_0 = arith.constant 0 : i32
    return %arg0, %c0_i32, %1 : i32, i32, i32
  }
  func.func @transform_1(%arg0: i32, %arg1: i32, %arg2: i32) -> (i32, i32, i32) {
    %c1_i32 = arith.constant 1 : i32
    %0 = arith.muli %arg1, %c1_i32 : i32
    %1 = arith.addi %0, %arg2 : i32
    %c0_i32 = arith.constant 0 : i32
    %c0_i32_0 = arith.constant 0 : i32
    return %arg0, %c0_i32, %1 : i32, i32, i32
  }
  func.func @transform_2(%arg0: i32, %arg1: i32, %arg2: i32) -> (i32, i32) {
    %c0_i32 = arith.constant 0 : i32
    %c0_i32_0 = arith.constant 0 : i32
    %c0_i32_1 = arith.constant 0 : i32
    return %c0_i32, %c0_i32_0 : i32, i32
  }
  func.func @transform_3(%arg0: i32, %arg1: i32, %arg2: i32) -> (i32, i32, i32, i32) {
    %c0_i32 = arith.constant 0 : i32
    %c0_i32_0 = arith.constant 0 : i32
    %c0_i32_1 = arith.constant 0 : i32
    return %arg0, %arg1, %c0_i32, %c0_i32_0 : i32, i32, i32, i32
  }
  func.func @transform_4(%arg0: i32, %arg1: i32, %arg2: i32) -> (i32, i32, i32, i32) {
    %c0_i32 = arith.constant 0 : i32
    %c0_i32_0 = arith.constant 0 : i32
    %c0_i32_1 = arith.constant 0 : i32
    return %arg0, %arg1, %c0_i32, %c0_i32_0 : i32, i32, i32, i32
  }
}

</mosaic_0001>

<llo_original>
// kernel: tpu_custom_call.1
$region0: #{tpu_custom_call.1}
  #allocation0 [shape = 'u32[]', space=smem, size = 0x4, offset = 0x4, fixed_abs, tag = 'smem constant byte address 0x4 - core index']
  #allocation1 [shape = 'u32[144,128]{1,0:T(1,128)}', space=vmem, size = 0x12000, scoped, tag = 'internal scratch']
  %s0 = inlined_call_operand.vmem [shape: f32[2,15,256], index: 0, kind: input, shape index: {}]
  %s1 = inlined_call_operand.vmem [shape: s32[2,1,256], index: 1, kind: input, shape index: {}]
  %s2 = inlined_call_operand.vmem [shape: f32[15,1], index: 2, kind: input, shape index: {}]
  %s3 = inlined_call_operand.hbm [shape: f32[2,1,1,256], index: 3, kind: output, shape index: {0}]
  %s4 = inlined_call_operand.hbm [shape: f32[2,1,1,256], index: 4, kind: output, shape index: {1}]
  %5 = xla_tuple %s3, %s4
  %s6 = sld [smem:[#allocation0]]
  $region57: #{tpu_custom_call.1} parent=0
    _
  %s8 = ssub.s32 1, %s6
  %s9 = scalar_select 0, %s8, %s6
  $region1: #{tpu_custom_call.1} parent=0
    #allocation2 [shape = 'u8[2048]{0}', space=vmem, size = 0x800, scoped, tag = 'output window, operand 0']
    #allocation3 [shape = 's32[2]{0}', space=sflag, size = 0x8, scoped, tag = 'scoped memory for tpu_custom_call.1']
    #allocation4 [shape = 'u8[2048]{0}', space=vmem, size = 0x800, scoped, tag = 'output window, operand 1']
    #allocation5 [shape = 's32[2]{0}', space=sflag, size = 0x8, scoped, tag = 'scoped memory for tpu_custom_call.1']
    %10 = vsyncpa [#allocation3], 0
    %s11 = scalar_lea.sflag [#allocation3], 1
    %12 = vsyncpa %s11, 0
    %13 = vsyncpa [#allocation5], 0
    %s14 = scalar_lea.sflag [#allocation5], 1
    %15 = vsyncpa %s14, 0
    loop: start=0, step=1, limit=4
    $region2: #{tpu_custom_call.1} parent=1 // loop_pre_header
      _
    $region3: #{tpu_custom_call.1} parent=1 // loop_header
      %s17 = sphi 0, %s21
      %p18 = scmp.ge.s32.totalorder %s17, 4
      %s24 = sphi 0, %s43
      %s25 = sphi 0, %s39
      %s26 = sphi 0, %s35
      %s27 = sphi 0, %s24
      %s28 = sphi 0, %s25
      %s29 = sphi 0, %s26
      %s30 = sphi 0, %s27
      %s31 = sphi 0, %s28
      %s32 = sphi 0, %s29
      %s50 = sphi 0, %s52
      %s53 = sphi 0, %s50
      %s54 = sphi 0, %s53
      %s70 = sphi 0, %s54
      %s80 = sphi 0, %s82
      %s83 = sphi 0, %s80
      %s84 = sphi 0, %s83
      %s100 = sphi 0, %s84
      %s104 = sphi 0, %s104
      %s106 = sphi 0, %s104
      %s107 = sphi 0, %s106
      %s121 = sphi 0, %s107
      %s129 = sphi 0, %s131
      %s132 = sphi 0, %s129
      %s133 = sphi 0, %s132
      %s149 = sphi 0, %s133
      %s157 = sphi 0, %s159
      %s160 = sphi 0, %s157
      %s161 = sphi 0, %s160
      %s177 = sphi 0, %s161
    $region4: #{tpu_custom_call.1} parent=1 // loop_header_branch
      %20 = sbr.rel (%p18) target = $region8
    $region5: #{tpu_custom_call.1} parent=1 // loop_body
      %s22 = ssub.s32 %s17, 1
      %s23 = ssub.s32 %s17, 2
      %s33 = sadd.s32 1, %s26
      %p34 = scmp.ge.s32.totalorder %s33, 1
      %s35 = scalar_select %p34, 0, %s33
      %s36 = sadd.s32 1, %s25
      %s37 = scalar_select %p34, %s36, %s25
      %p38 = scmp.ge.s32.totalorder %s37, 1
      %s39 = scalar_select %p38, 0, %s37
      %s40 = sadd.s32 1, %s24
      %s41 = scalar_select %p38, %s40, %s24
      %p42 = scmp.ge.s32.totalorder %s41, 2
      %s43 = scalar_select %p42, 0, %s41
      %s44 = sadd.s32 %s25, %s26
      %s45 = sadd.s32 %s39, %s35
      %s46 = ssub.s32 %s24, %s43
      %s47 = ssub.s32 %s44, %s45
      %s48 = sor.u32 %s46, %s47
      %p49 = scmp.eq.s32.totalorder %s48, 0
      %s51 = sadd.s32 %s50, 1
      %s52 = scalar_select %p49, %s50, %s51
      %p55 = pneg %p49
      %p56 = scmp.eq.s32.totalorder %s17, 1
      %p57 = por %p55, %p56
      %p58 = scmp.ne.s32.totalorder %s50, %s53
      %p59 = scmp.eq.s32.totalorder %s17, 0
      %p60 = por %p58, %p59
      %p61 = scmp.ne.s32.totalorder %s50, %s53
      %p62 = scmp.eq.s32.totalorder %s22, 1
      %p63 = por %p61, %p62
      %p64 = scmp.ne.s32.totalorder %s53, %s54
      %p65 = scmp.eq.s32.totalorder %s22, 0
      %p66 = por %p64, %p65
      %p67 = scmp.ne.s32.totalorder %s53, %s54
      %p68 = scmp.eq.s32.totalorder %s23, 1
      %p69 = por %p67, %p68
      %p71 = scmp.ne.s32.totalorder %s54, %s70
      %p72 = scmp.eq.s32.totalorder %s23, 0
      %p73 = por %p71, %p72
      %s74 = sadd.s32 %s25, %s26
      %s75 = sadd.s32 %s39, %s35
      %s76 = ssub.s32 %s24, %s43
      %s77 = ssub.s32 %s74, %s75
      %s78 = sor.u32 %s76, %s77
      %p79 = scmp.eq.s32.totalorder %s78, 0
      %s81 = sadd.s32 %s80, 1
      %s82 = scalar_select %p79, %s80, %s81
      %p85 = pneg %p79
      %p86 = scmp.eq.s32.totalorder %s17, 1
      %p87 = por %p85, %p86
      %p88 = scmp.ne.s32.totalorder %s80, %s83
      %p89 = scmp.eq.s32.totalorder %s17, 0
      %p90 = por %p88, %p89
      %p91 = scmp.ne.s32.totalorder %s80, %s83
      %p92 = scmp.eq.s32.totalorder %s22, 1
      %p93 = por %p91, %p92
      %p94 = scmp.ne.s32.totalorder %s83, %s84
      %p95 = scmp.eq.s32.totalorder %s22, 0
      %p96 = por %p94, %p95
      %p97 = scmp.ne.s32.totalorder %s83, %s84
      %p98 = scmp.eq.s32.totalorder %s23, 1
      %p99 = por %p97, %p98
      %p101 = scmp.ne.s32.totalorder %s84, %s100
      %p102 = scmp.eq.s32.totalorder %s23, 0
      %p103 = por %p101, %p102
      %s105 = sadd.s32 %s104, 1
      %p108 = scmp.eq.s32.totalorder %s17, 1
      %p109 = scmp.ne.s32.totalorder %s104, %s106
      %p110 = scmp.eq.s32.totalorder %s17, 0
      %p111 = por %p109, %p110
      %p112 = scmp.ne.s32.totalorder %s104, %s106
      %p113 = scmp.eq.s32.totalorder %s22, 1
      %p114 = por %p112, %p113
      %p115 = scmp.ne.s32.totalorder %s106, %s107
      %p116 = scmp.eq.s32.totalorder %s22, 0
      %p117 = por %p115, %p116
      %p118 = scmp.ne.s32.totalorder %s106, %s107
      %p119 = scmp.eq.s32.totalorder %s23, 1
      %p120 = por %p118, %p119
      %p122 = scmp.ne.s32.totalorder %s107, %s121
      %p123 = scmp.eq.s32.totalorder %s23, 0
      %p124 = por %p122, %p123
      %s125 = ssub.s32 %s24, %s43
      %s126 = ssub.s32 %s25, %s39
      %s127 = sor.u32 %s125, %s126
      %p128 = scmp.eq.s32.totalorder %s127, 0
      %s130 = sadd.s32 %s129, 1
      %s131 = scalar_select %p128, %s129, %s130
      %p134 = pneg %p128
      %p135 = scmp.eq.s32.totalorder %s17, 1
      %p136 = por %p134, %p135
      %p137 = scmp.ne.s32.totalorder %s129, %s132
      %p138 = scmp.eq.s32.totalorder %s17, 0
      %p139 = por %p137, %p138
      %p140 = scmp.ne.s32.totalorder %s129, %s132
      %p141 = scmp.eq.s32.totalorder %s22, 1
      %p142 = por %p140, %p141
      %p143 = scmp.ne.s32.totalorder %s132, %s133
      %p144 = scmp.eq.s32.totalorder %s22, 0
      %p145 = por %p143, %p144
      %p146 = scmp.ne.s32.totalorder %s132, %s133
      %p147 = scmp.eq.s32.totalorder %s23, 1
      %p148 = por %p146, %p147
      %p150 = scmp.ne.s32.totalorder %s133, %s149
      %p151 = scmp.eq.s32.totalorder %s23, 0
      %p152 = por %p150, %p151
      %s153 = ssub.s32 %s24, %s43
      %s154 = ssub.s32 %s25, %s39
      %s155 = sor.u32 %s153, %s154
      %p156 = scmp.eq.s32.totalorder %s155, 0
      %s158 = sadd.s32 %s157, 1
      %s159 = scalar_select %p156, %s157, %s158
      %p162 = pneg %p156
      %p163 = scmp.eq.s32.totalorder %s17, 1
      %p164 = por %p162, %p163
      %p165 = scmp.ne.s32.totalorder %s157, %s160
      %p166 = scmp.eq.s32.totalorder %s17, 0
      %p167 = por %p165, %p166
      %p168 = scmp.ne.s32.totalorder %s157, %s160
      %p169 = scmp.eq.s32.totalorder %s22, 1
      %p170 = por %p168, %p169
      %p171 = scmp.ne.s32.totalorder %s160, %s161
      %p172 = scmp.eq.s32.totalorder %s22, 0
      %p173 = por %p171, %p172
      %p174 = scmp.ne.s32.totalorder %s160, %s161
      %p175 = scmp.eq.s32.totalorder %s23, 1
      %p176 = por %p174, %p175
      %p178 = scmp.ne.s32.totalorder %s161, %s177
      %p179 = scmp.eq.s32.totalorder %s23, 0
      %p180 = por %p178, %p179
      %p181 = scmp.le.s32.totalorder 1, %s17
      %p182 = scmp.lt.s32.totalorder %s17, 3
      %p183 = pnand %p181, %p182
      %p184 = pneg %p183
      // Predicated region
      $region9: #{tpu_custom_call.1} parent=5 // pred_check
        _
      $region10: #{tpu_custom_call.1} parent=5 // pred_check_branch
        %186 = sbr.rel (%p183) target = $region12
      $region11: #{tpu_custom_call.1} parent=5 // pred_region
        %s187 = ssub.s32 %s17, 1
        // Predicated region
        $region13: #{tpu_custom_call.1} parent=11 // pred_check
          %p188 = pneg %p117
        $region14: #{tpu_custom_call.1} parent=11 // pred_check_branch
          %190 = sbr.rel (%p188) target = $region16
        $region15: #{tpu_custom_call.1} parent=11 // pred_region
          _
        $region16: #{tpu_custom_call.1} parent=11 // pred_fallthru
          _
      $region12: #{tpu_custom_call.1} parent=5 // pred_fallthru
        _
      %p191 = scmp.lt.s32.totalorder %s17, 2
      // Predicated region
      $region17: #{tpu_custom_call.1} parent=5 // pred_check
        %p192 = pneg %p191
      $region18: #{tpu_custom_call.1} parent=5 // pred_check_branch
        %194 = sbr.rel (%p192) target = $region20
      $region19: #{tpu_custom_call.1} parent=5 // pred_region
        // Predicated region
        $region21: #{tpu_custom_call.1} parent=19 // pred_check
          %p195 = pneg %p60
        $region22: #{tpu_custom_call.1} parent=19 // pred_check_branch
          %197 = sbr.rel (%p195) target = $region24
        $region23: #{tpu_custom_call.1} parent=19 // pred_region
          %s198 = sadd.s32 %s25, %s26
          %s199 = smul.u32 2, %s198
          %p200 = scmp.lt.s32.totalorder %s24, 1
          %s201 = scalar_select %p200, %s24, 1
          %p202 = scmp.lt.s32.totalorder %s199, 1
          %s203 = scalar_select %p202, %s199, 1
          %s204 = smul.addr %s201, 4
          %s205 = sadd.s32 %s203, %s204
          %s206 = smul.addr %s205, 8
          %s207 = scalar_lea.vmem %s0, %s206
          %s208 = sadd.s32 %s25, %s26
          %s209 = smul.u32 2, %s208
        $region24: #{tpu_custom_call.1} parent=19 // pred_fallthru
          _
        // Predicated region
        $region25: #{tpu_custom_call.1} parent=19 // pred_check
          %p210 = pneg %p90
        $region26: #{tpu_custom_call.1} parent=19 // pred_check_branch
          %212 = sbr.rel (%p210) target = $region28
        $region27: #{tpu_custom_call.1} parent=19 // pred_region
          %s213 = sadd.s32 %s25, %s26
          %s214 = smul.u32 2, %s213
          %p215 = scmp.lt.s32.totalorder %s24, 1
          %s216 = scalar_select %p215, %s24, 1
          %p217 = scmp.lt.s32.totalorder %s214, 1
          %s218 = scalar_select %p217, %s214, 1
          %s219 = smul.addr %s216, 2
          %s220 = sadd.s32 %s218, %s219
          %s221 = scalar_lea.vmem %s1, %s220
          %s222 = sadd.s32 %s25, %s26
          %s223 = smul.u32 2, %s222
        $region28: #{tpu_custom_call.1} parent=19 // pred_fallthru
          _
      $region20: #{tpu_custom_call.1} parent=5 // pred_fallthru
        _
      %p224 = scmp.le.s32.totalorder 1, %s17
      %p225 = scmp.lt.s32.totalorder %s17, 3
      %p226 = pnand %p224, %p225
      %p227 = pneg %p226
      // Predicated region
      $region29: #{tpu_custom_call.1} parent=5 // pred_check
        _
      $region30: #{tpu_custom_call.1} parent=5 // pred_check_branch
        %229 = sbr.rel (%p226) target = $region32
      $region31: #{tpu_custom_call.1} parent=5 // pred_region
        %s230 = ssub.s32 %s17, 1
        %s231 = sadd.s32 %s28, %s29
        %s232 = smul.u32 2, %s231
        %p233 = scmp.lt.s32.totalorder %s27, 1
        %s234 = scalar_select %p233, %s27, 1
        %p235 = scmp.lt.s32.totalorder %s232, 1
        %s236 = scalar_select %p235, %s232, 1
        %s237 = smul.addr %s234, 4
        %s238 = sadd.s32 %s236, %s237
        %s239 = smul.addr %s238, 8
        %s240 = scalar_lea.vmem %s0, %s239
        %p241 = pneg %p66
        %p242 = pneg %p63
        %s243 = sadd.s32 %s28, %s29
        %s244 = smul.u32 2, %s243
        %p245 = scmp.lt.s32.totalorder %s27, 1
        %s246 = scalar_select %p245, %s27, 1
        %p247 = scmp.lt.s32.totalorder %s244, 1
        %s248 = scalar_select %p247, %s244, 1
        %s249 = smul.addr %s246, 2
        %s250 = sadd.s32 %s248, %s249
        %s251 = scalar_lea.vmem %s1, %s250
        %p252 = pneg %p96
        %p253 = pneg %p93
        %p254 = pneg %p117
        %p255 = pneg %p114
        %p256 = pneg %p145
        %p257 = pneg %p142
        %s258 = sand.u32 %s132, 1
        %s259 = scalar_lea.sflag [#allocation3], %s258
        %s260 = sand.u32 %s132, 1
        %s261 = smul.addr %s260, 2
        %s262 = scalar_lea.vmem [#allocation2], %s261
        %p263 = pneg %p173
        %p264 = pneg %p170
        %s265 = sand.u32 %s160, 1
        %s266 = scalar_lea.sflag [#allocation5], %s265
        %s267 = sand.u32 %s160, 1
        %s268 = smul.addr %s267, 2
        %s269 = scalar_lea.vmem [#allocation4], %s268
        %s270 = sadd.s32 %s28, %s29
        %s271 = smul.u32 2, %s270
        %p272 = scmp.lt.s32.totalorder %s27, 1
        %s273 = scalar_select %p272, %s27, 1
        %p274 = scmp.lt.s32.totalorder %s271, 1
        %s275 = scalar_select %p274, %s271, 1
        %s276 = smul.addr %s273, 4
        %s277 = sadd.s32 %s275, %s276
        %s278 = smul.addr %s277, 8
        %s279 = scalar_lea.vmem %s0, %s278
        %s280 = sadd.s32 %s28, %s29
        %s281 = smul.u32 2, %s280
        %s282 = sadd.s32 %s28, %s29
        %s283 = smul.u32 2, %s282
        %p284 = scmp.lt.s32.totalorder %s27, 1
        %s285 = scalar_select %p284, %s27, 1
        %p286 = scmp.lt.s32.totalorder %s283, 1
        %s287 = scalar_select %p286, %s283, 1
        %s288 = smul.addr %s285, 2
        %s289 = sadd.s32 %s287, %s288
        %s290 = scalar_lea.vmem %s1, %s289
        %s291 = sadd.s32 %s28, %s29
        %s292 = smul.u32 2, %s291
        %p293 = scmp.eq.s32.totalorder %s29, 0
        // Predicated region
        $region33: #{tpu_custom_call.1} parent=31 // pred_check
          %p294 = pneg %p293
        $region34: #{tpu_custom_call.1} parent=31 // pred_check_branch
          %296 = sbr.rel (%p294) target = $region36
        $region35: #{tpu_custom_call.1} parent=31 // pred_region
          %v297 = vlaneseq
          %vm298 = vcmp.ge.s32.totalorder %v297, 0
          %vm299 = vcmp.lt.s32.totalorder %v297, 256
          %vm300 = vmand %vm298, %vm299
          %301 = vst.msk [vmem:[%s262] sm:$0x3] %vm300, 0.0
          %302 = vst.msk [vmem:[%s269] sm:$0x3] %vm300, 0.0
        $region36: #{tpu_custom_call.1} parent=31 // pred_fallthru
          _
        %v303 = vld [vmem:[%s279] sm:$0xff]
        %v304 = vld [vmem:[%s279 + $0x8] sm:$0xff]
        %v305 = vld [vmem:[%s279 + $0x10] sm:$0x7f]
        %v306 = vld [vmem:[%s279 + $0x18] sm:$0x7f]
        %v307 = vld [vmem:[%s290] sm:$0x3]
        %vm308 = vcmask 1046528
        %v309 = vsel %vm308, %v305, -inf
        %v310 = vmax.f32 %v303, %v309
        %v311 = vrot.slane %v310, 4
        %v312 = vmax.f32 %v310, %v311
        %v313 = vrot.slane %v312, 2
        %v314 = vmax.f32 %v312, %v313
        %v315 = vrot.slane %v314, 1
        %v316 = vmax.f32 %v314, %v315
        %v317 = vsel %vm308, %v306, -inf
        %v318 = vmax.f32 %v304, %v317
        %v319 = vrot.slane %v318, 4
        %v320 = vmax.f32 %v318, %v319
        %v321 = vrot.slane %v320, 2
        %v322 = vmax.f32 %v320, %v321
        %v323 = vrot.slane %v322, 1
        %v324 = vmax.f32 %v322, %v323
        %v325 = vsub.f32 %v303, %v316
        %v326 = vsub.f32 %v304, %v324
        %v327 = vsub.f32 %v305, %v316
        %v328 = vsub.f32 %v306, %v324
        %v329 = vmul.f32 %v325, 1.442695
        %v330 = vpow.pop %v329
        %v331 = vmul.f32 %v326, 1.442695
        %v332 = vpow.pop %v331
        %v333 = vmul.f32 %v327, 1.442695
        %v334 = vpow.pop %v333
        %v335 = vmul.f32 %v328, 1.442695
        %v336 = vpow.pop %v335
        %v337 = vsel %vm308, %v334, 0.0
        %v338 = vadd.f32 %v330, %v337
        %v339 = vrot.slane %v338, 4
        %v340 = vadd.f32 %v338, %v339
        %v341 = vrot.slane %v340, 2
        %v342 = vadd.f32 %v340, %v341
        %v343 = vrot.slane %v342, 1
        %v344 = vadd.f32 %v342, %v343
        %v345 = vsel %vm308, %v336, 0.0
        %v346 = vadd.f32 %v332, %v345
        %v347 = vrot.slane %v346, 4
        %v348 = vadd.f32 %v346, %v347
        %v349 = vrot.slane %v348, 2
        %v350 = vadd.f32 %v348, %v349
        %v351 = vrot.slane %v350, 1
        %v352 = vadd.f32 %v350, %v351
        %v353 = vlog2.pop %v344
        %v354 = vmul.f32 %v353, 0.6931472
        %v355 = vlog2.pop %v352
        %v356 = vmul.f32 %v355, 0.6931472
        %v357 = vlaneseq
        %v358 = vshrl.u32 %v357, 7
        %v359 = vadd.s32 %v358, 8
        %v360 = vlaneseq
        %v361 = vshrl.u32 %v360, 7
        %v362 = vsub.s32 0, %v361
        %v363 = vrot.slane %v307, %v362
        %v364 = vlaneseq
        %v365 = vshrl.u32 %v364, 7
        %v366 = vsub.s32 1, %v365
        %v367 = vrot.slane %v307, %v366
        %vm368 = vcmp.eq.s32.totalorder %v358, %v363
        %vm369 = vcmp.eq.s32.totalorder %v358, %v367
        %vm370 = vcmp.eq.s32.totalorder %v359, %v363
        %vm371 = vcmp.eq.s32.totalorder %v359, %v367
        %v372 = vsel %vm368, %v325, 0.0
        %v373 = vsel %vm369, %v326, 0.0
        %v374 = vsel %vm370, %v327, 0.0
        %v375 = vsel %vm371, %v328, 0.0
        %v376 = vsel %vm308, %v374, 0.0
        %v377 = vadd.f32 %v372, %v376
        %v378 = vrot.slane %v377, 4
        %v379 = vadd.f32 %v377, %v378
        %v380 = vrot.slane %v379, 2
        %v381 = vadd.f32 %v379, %v380
        %v382 = vrot.slane %v381, 1
        %v383 = vadd.f32 %v381, %v382
        %v384 = vsel %vm308, %v375, 0.0
        %v385 = vadd.f32 %v373, %v384
        %v386 = vrot.slane %v385, 4
        %v387 = vadd.f32 %v385, %v386
        %v388 = vrot.slane %v387, 2
        %v389 = vadd.f32 %v387, %v388
        %v390 = vrot.slane %v389, 1
        %v391 = vadd.f32 %v389, %v390
        %v392 = vsub.f32 %v383, %v354
        %v393 = vsub.f32 %v391, %v356
        %v394 = vmul.f32 %v392, 1.442695
        %v395 = vpow.pop %v394
        %v396 = vmul.f32 %v393, 1.442695
        %v397 = vpow.pop %v396
        %v398 = vadd.f32 %v395, 1e-10
        %v399 = vadd.f32 %v397, 1e-10
        %v400 = vlog2.pop %v398
        %v401 = vmul.f32 %v400, 0.6931472
        %v402 = vlog2.pop %v399
        %v403 = vmul.f32 %v402, 0.6931472
        %v404 = vld [vmem:[%s2] sm:$0xff]
        %v405 = vld [vmem:[%s2 + $0x8] sm:$0x7f]
        %407 = vset.pattern.permute.xlu0 0
        %408 = vperm.xlu0 %407, %v404
        %v409 = vpop.permute.xlu0 %408
        %412 = vset.pattern.permute.xlu0 0
        %413 = vperm.xlu0 %412, %v405
        %v414 = vpop.permute.xlu0 %413
        %v416 = vsel %vm368, %v409, 0.0
        %v417 = vsel %vm369, %v409, 0.0
        %v418 = vsel %vm370, %v414, 0.0
        %v419 = vsel %vm371, %v414, 0.0
        %v420 = vsel %vm308, %v418, 0.0
        %v421 = vadd.f32 %v416, %v420
        %v422 = vrot.slane %v421, 4
        %v423 = vadd.f32 %v421, %v422
        %v424 = vrot.slane %v423, 2
        %v425 = vadd.f32 %v423, %v424
        %v426 = vrot.slane %v425, 1
        %v427 = vadd.f32 %v425, %v426
        %v428 = vsel %vm308, %v419, 0.0
        %v429 = vadd.f32 %v417, %v428
        %v430 = vrot.slane %v429, 4
        %v431 = vadd.f32 %v429, %v430
        %v432 = vrot.slane %v431, 2
        %v433 = vadd.f32 %v431, %v432
        %v434 = vrot.slane %v433, 1
        %v435 = vadd.f32 %v433, %v434
        %v436 = vsub.f32 1.0, %v398
        %v437 = vsub.f32 1.0, %v399
        %v438 = vmul.f32 %v436, %v436
        %v439 = vmul.f32 %v437, %v437
        %v440 = vsub.f32 0.0, %v401
        %v441 = vsub.f32 0.0, %v403
        %v442 = vmul.f32 %v438, %v440
        %v443 = vmul.f32 %v439, %v441
        %v444 = vld [vmem:[%s262] sm:$0x3]
        %v447 = vcombine.low %v427, %v435
        %v449 = vunpack.c.l.s4 1966171168
        %v450 = vunpack.c.0.s8 %v449
        %v451 = vlaneseq
        %v452 = vshrl.u32 %v451, 7
        %v453 = vsub.s32 %v450, %v452
        %v454 = vrot.slane %v447, %v453
        %v456 = vunpack.c.l.s4 1966171168
        %v457 = vunpack.c.0.s8 %v456
        %v458 = vlaneseq
        %v459 = vshrl.u32 %v458, 7
        %v460 = vsub.s32 %v457, %v459
        %v461 = vrot.slane %v454, %v460
        %v463 = vadd.f32 %v444, %v461
        %v464 = vlaneseq
        %vm465 = vcmp.ge.s32.totalorder %v464, 0
        %vm466 = vcmp.lt.s32.totalorder %v464, 256
        %vm467 = vmand %vm465, %vm466
        %468 = vst.msk [vmem:[%s262] sm:$0x3] %vm467, %v463
        %v469 = vld [vmem:[%s269] sm:$0x3]
        %v472 = vcombine.low %v442, %v443
        %v474 = vunpack.c.l.s4 1966171168
        %v475 = vunpack.c.0.s8 %v474
        %v476 = vlaneseq
        %v477 = vshrl.u32 %v476, 7
        %v478 = vsub.s32 %v475, %v477
        %v479 = vrot.slane %v472, %v478
        %v481 = vunpack.c.l.s4 1966171168
        %v482 = vunpack.c.0.s8 %v481
        %v483 = vlaneseq
        %v484 = vshrl.u32 %v483, 7
        %v485 = vsub.s32 %v482, %v484
        %v486 = vrot.slane %v479, %v485
        %v488 = vadd.f32 %v469, %v486
        %489 = vst.msk [vmem:[%s269] sm:$0x3] %vm467, %v488
        %s490 = sand.u32 %s132, 1
        %s491 = scalar_lea.sflag [#allocation3], %s490
        %s492 = sand.u32 %s132, 1
        %s493 = smul.addr %s492, 2
        %s494 = scalar_lea.vmem [#allocation2], %s493
        %s495 = sand.u32 %s160, 1
        %s496 = scalar_lea.sflag [#allocation5], %s495
        %s497 = sand.u32 %s160, 1
        %s498 = smul.addr %s497, 2
        %s499 = scalar_lea.vmem [#allocation4], %s498
        // Predicated region
        $region37: #{tpu_custom_call.1} parent=31 // pred_check
          %p500 = pneg %p142
        $region38: #{tpu_custom_call.1} parent=31 // pred_check_branch
          %502 = sbr.rel (%p500) target = $region40
        $region39: #{tpu_custom_call.1} parent=31 // pred_region
          %s504 = ssub.s32 32, 32
          %505 = vsyncadd %s491, %s504
          %s506 = smul.addr %s28, 2
          %s507 = smul.addr %s27, 2
          %s508 = sadd.s32 %s506, %s507
          %s509 = smul.addr %s508, 16
          %s510 = scalar_lea.hbm %s3, %s509
          %s512 = sshll.u32 %s494, 4
          %s513 = int_to_ptr.vmem [resolvable:$true] %s512
          %515 = dma.vmem_to_hbm [thread:$0]  %s513, 32, %s510, %s491
        $region40: #{tpu_custom_call.1} parent=31 // pred_fallthru
          _
        // Predicated region
        $region41: #{tpu_custom_call.1} parent=31 // pred_check
          %p516 = pneg %p170
        $region42: #{tpu_custom_call.1} parent=31 // pred_check_branch
          %518 = sbr.rel (%p516) target = $region44
        $region43: #{tpu_custom_call.1} parent=31 // pred_region
          %s520 = ssub.s32 32, 32
          %521 = vsyncadd %s496, %s520
          %s522 = smul.addr %s28, 2
          %s523 = smul.addr %s27, 2
          %s524 = sadd.s32 %s522, %s523
          %s525 = smul.addr %s524, 16
          %s526 = scalar_lea.hbm %s4, %s525
          %s528 = sshll.u32 %s499, 4
          %s529 = int_to_ptr.vmem [resolvable:$true] %s528
          %531 = dma.vmem_to_hbm [thread:$0]  %s529, 32, %s526, %s496
        $region44: #{tpu_custom_call.1} parent=31 // pred_fallthru
          _
      $region32: #{tpu_custom_call.1} parent=5 // pred_fallthru
        _
      %p532 = scmp.le.s32.totalorder 2, %s17
      // Predicated region
      $region45: #{tpu_custom_call.1} parent=5 // pred_check
        %p533 = pneg %p532
      $region46: #{tpu_custom_call.1} parent=5 // pred_check_branch
        %535 = sbr.rel (%p533) target = $region48
      $region47: #{tpu_custom_call.1} parent=5 // pred_region
        %s536 = ssub.s32 %s17, 2
        // Predicated region
        $region49: #{tpu_custom_call.1} parent=47 // pred_check
          %p537 = pneg %p148
        $region50: #{tpu_custom_call.1} parent=47 // pred_check_branch
          %539 = sbr.rel (%p537) target = $region52
        $region51: #{tpu_custom_call.1} parent=47 // pred_region
          %s540 = sand.u32 %s133, 1
          %s541 = scalar_lea.sflag [#allocation3], %s540
          %s542 = sand.u32 %s133, 1
          %s543 = smul.addr %s542, 2
          %s544 = scalar_lea.vmem [#allocation2], %s543
          %545 = dma.done %s541, 32
        $region52: #{tpu_custom_call.1} parent=47 // pred_fallthru
          _
        // Predicated region
        $region53: #{tpu_custom_call.1} parent=47 // pred_check
          %p546 = pneg %p176
        $region54: #{tpu_custom_call.1} parent=47 // pred_check_branch
          %548 = sbr.rel (%p546) target = $region56
        $region55: #{tpu_custom_call.1} parent=47 // pred_region
          %s549 = sand.u32 %s161, 1
          %s550 = scalar_lea.sflag [#allocation5], %s549
          %s551 = sand.u32 %s161, 1
          %s552 = smul.addr %s551, 2
          %s553 = scalar_lea.vmem [#allocation4], %s552
          %554 = dma.done %s550, 32
        $region56: #{tpu_custom_call.1} parent=47 // pred_fallthru
          _
      $region48: #{tpu_custom_call.1} parent=5 // pred_fallthru
        _
    $region6: #{tpu_custom_call.1} parent=1 // loop_footer
      %s21 = sadd.s32 1, %s17
    $region7: #{tpu_custom_call.1} parent=1 // loop_footer_branch
      %16 = sbr.rel target = $region3
    $region8: #{tpu_custom_call.1} parent=1 // loop_exit
      _
    %555 = vsyncpa [#allocation3], 1
    %s556 = scalar_lea.sflag [#allocation3], 1
    %557 = vsyncpa %s556, 1
    %558 = vsyncpa [#allocation5], 1
    %s559 = scalar_lea.sflag [#allocation5], 1
    %560 = vsyncpa %s559, 1

</llo_original>
